<compile_context>
chip_gen: v7x
topology: tpu7x:2x2x1
jax: 0.10.0
libtpu: 0.0.40
codegen_flags: <defaults>
</compile_context>

<pallas_src>
import numpy as np
import jax
import jax.numpy as jnp
from jax.experimental import pallas as pl
from jax.experimental.pallas import tpu as pltpu

VMEM_SPEC = pl.BlockSpec(memory_space=pltpu.MemorySpace.VMEM)
SMEM_SPEC = pl.BlockSpec(memory_space=pltpu.MemorySpace.SMEM)


# --------------------------------------------------------------------------
# Fused head kernel
# --------------------------------------------------------------------------
def _fused_head_kernel(idx_ref, n_true_ref,
                       content_ref, p_ref, r_ref, eps_ref,
                       w_e2p_ref, b_e2p_ref,
                       w_ph_ref, b_ph_ref,
                       w_muvar_ref, b_muvar_ref,
                       w_cls_ref, b_cls_ref,
                       w_c2d_ref, b_c2d_ref,
                       w_c2de_ref, b_c2de_ref,
                       packed_ref):
    f32 = jnp.float32
    n_pad = packed_ref.shape[0]
    m_rows = content_ref.shape[0]
    dc = content_ref.shape[1]
    de = p_ref.shape[1]

    def mm_bf16(x, w_ref):
        # weights are pre-cast to bf16 on the host; f32 accumulation on the MXU.
        return jnp.dot(x.astype(jnp.bfloat16), w_ref[...],
                       preferred_element_type=f32)

    def mm_f32(x, w_ref):
        return jnp.dot(x, w_ref[...], preferred_element_type=f32)

    # ---- in-kernel gather (torch.cat([x[i, :l//2]...])) as a one-hot MXU matmul.
    # Pad rows carry idx = -1 -> all-zero one-hot row -> zero feature row.
    idx = idx_ref[...]                                                 # (n_pad, 1) i32
    col = jax.lax.broadcasted_iota(jnp.int32, (n_pad, m_rows), 1)
    onehot = (col == idx).astype(f32)                                  # (n_pad, M)
    full = jnp.concatenate([content_ref[...], p_ref[...], r_ref[...]], axis=1)
    gathered = jnp.dot(onehot, full, preferred_element_type=f32)       # exact in f32
    content = gathered[:, :dc]
    p = gathered[:, dc:dc + de]
    r = gathered[:, dc + de:dc + 2 * de]

    # ---- emp_policy: emotion2pre(tanh) -> prior_h(tanh) -> fused mu|softplus(var)
    #      -> R_prior = mu + sqrt(var) * eps
    h0 = jnp.tanh(mm_bf16(p, w_e2p_ref) + b_e2p_ref[...])
    h1 = jnp.tanh(mm_bf16(h0, w_ph_ref) + b_ph_ref[...])
    muvar = mm_bf16(h1, w_muvar_ref) + b_muvar_ref[...]                # (n_pad, 2*D_e)
    mu = muvar[:, :de]
    var = jnp.logaddexp(muvar[:, de:], 0.0)                            # softplus
    r_prior = mu + jnp.sqrt(var) * eps_ref[...]

    # ---- shared emo_classification: one batched f32 matmul over [P ; R ; R_prior]
    # TODO(synk): training-mode dropout on R_prior before classification omitted
    # (identity in eval mode).
    cls_in = jnp.concatenate([p, r, r_prior], axis=0)                  # (3*n_pad, D_e)
    logits = mm_f32(cls_in, w_cls_ref) + b_cls_ref[...]
    nc = logits.shape[1]
    p_pre = logits[:n_pad]
    r_pre = logits[n_pad:2 * n_pad]
    r_prior_pre = logits[2 * n_pad:]

    # ---- kl_div(log_softmax(r_prior_pre), softmax(r_pre)), reduction='mean'
    lp = r_prior_pre
    lq = r_pre
    lp_max = jnp.max(lp, axis=-1, keepdims=True)
    log_input = lp - lp_max - jnp.log(
        jnp.sum(jnp.exp(lp - lp_max), axis=-1, keepdims=True))
    lq_max = jnp.max(lq, axis=-1, keepdims=True)
    log_target = lq - lq_max - jnp.log(
        jnp.sum(jnp.exp(lq - lq_max), axis=-1, keepdims=True))
    target = jnp.exp(log_target)
    pointwise = target * (log_target - log_input)
    # Mask padded rows with the runtime n_true scalar (SMEM); mean over true elements.
    n_true = n_true_ref[0]
    row_ids = jax.lax.broadcasted_iota(jnp.int32, pointwise.shape, 0)
    pointwise = jnp.where(row_ids < n_true, pointwise, 0.0)
    kl_total = jnp.sum(jnp.sum(pointwise, axis=1, keepdims=True),
                       axis=0, keepdims=True)
    kl = kl_total / (n_true.astype(f32) * float(nc))                   # (1, 1)

    # ---- context2decoder / context2decoder_emotion (FeedForward == Linear + tanh)
    dec_init = jnp.tanh(mm_bf16(content, w_c2d_ref) + b_c2d_ref[...])
    r_proj = jnp.tanh(mm_bf16(r_prior, w_c2de_ref) + b_c2de_ref[...])

    # ---- pack all outputs in-register and do ONE unmasked full-width store:
    #      [ dec_init | r_proj | p_pre | r_pre | kl broadcast over pad lanes ]
    dh = dec_init.shape[1]
    used = dh + de + 2 * nc
    out_w = packed_ref.shape[1]
    slab = jnp.concatenate(
        [dec_init, r_proj, p_pre, r_pre,
         jnp.broadcast_to(kl, (n_pad, out_w - used))], axis=1)
    packed_ref[...] = slab


def _fused_head(idx, n_true_arr, content_full, p_full, r_full, eps, params):
    n_pad = idx.shape[0]
    dh = params["w_c2d"].shape[1]
    de = params["w_c2de"].shape[1]
    nc = params["w_cls"].shape[1]
    used = dh + de + 2 * nc
    out_w = max(128, pl.cdiv(used + 1, 128) * 128)   # lane-dense output width

    args = (idx, n_true_arr, content_full, p_full, r_full, eps,
            params["w_e2p"], params["b_e2p"],
            params["w_ph"], params["b_ph"],
            params["w_muvar"], params["b_muvar"],
            params["w_cls"], params["b_cls"],
            params["w_c2d"], params["b_c2d"],
            params["w_c2de"], params["b_c2de"])
    in_specs = [VMEM_SPEC, SMEM_SPEC] + [VMEM_SPEC] * (len(args) - 2)

    packed = pl.pallas_call(
        _fused_head_kernel,
        out_shape=jax.ShapeDtypeStruct((n_pad, out_w), jnp.float32),
        in_specs=in_specs,
        out_specs=VMEM_SPEC,
    )(*args)
    # TODO(synk): when N grows to hundreds of rows, add a 1-D row grid (tile 256)
    # with dimension_semantics=("parallel",) and full-block weight specs so v7x's
    # two TensorCores split the rows; no vmem_limit changes are needed at these sizes.
    return packed, (dh, de, nc, used)


# --------------------------------------------------------------------------
# Wrapper reproducing the tail of ETHREED.forward
# --------------------------------------------------------------------------
def prepare_params(raw):
    """Host-side, one-time: fuse prior_mu/prior_var, pre-cast weights to bf16
    (classifier kept f32 so the KL(log_softmax, softmax) path stays fp32-accurate)."""
    bf16 = jnp.bfloat16
    p = {}
    p["w_e2p"], p["b_e2p"] = raw["w_e2p"].astype(bf16), raw["b_e2p"]
    p["w_ph"], p["b_ph"] = raw["w_ph"].astype(bf16), raw["b_ph"]
    p["w_muvar"] = jnp.concatenate([raw["w_mu"], raw["w_var"]], axis=1).astype(bf16)
    p["b_muvar"] = jnp.concatenate([raw["b_mu"], raw["b_var"]], axis=1)
    p["w_cls"], p["b_cls"] = raw["w_cls"], raw["b_cls"]          # f32 classifier
    p["w_c2d"], p["b_c2d"] = raw["w_c2d"].astype(bf16), raw["b_c2d"]
    p["w_c2de"], p["b_c2de"] = raw["w_c2de"].astype(bf16), raw["b_c2de"]
    return p


def ethreed_head(content, P_sen_emotions, R_sen_emotions, conversation_lengths,
                 params, eps, n_layers_decoder=1):
    B, half_max, Dc = content.shape

    # glue: row indices of torch.cat([x[i, :l//2, :] ...]); pad rows get idx = -1
    idx_np = np.concatenate(
        [i * half_max + np.arange(int(l) // 2)
         for i, l in enumerate(conversation_lengths)]).astype(np.int32)
    n_true = int(idx_np.shape[0])
    n_pad = ((n_true + 7) // 8) * 8
    idx_full = np.full((n_pad, 1), -1, np.int32)
    idx_full[:n_true, 0] = idx_np
    idx = jnp.asarray(idx_full)
    n_true_arr = jnp.asarray([n_true], jnp.int32)

    # full feature slabs go straight to VMEM; the gather happens inside the kernel.
    content_full = content.reshape(B * half_max, Dc)
    p_full = P_sen_emotions.reshape(B * half_max, P_sen_emotions.shape[-1])
    r_full = R_sen_emotions.reshape(B * half_max, R_sen_emotions.shape[-1])

    pad = n_pad - n_true
    eps_p = jnp.pad(eps, ((0, pad), (0, 0))) if pad else eps

    packed, (dh, de, nc, used) = _fused_head(
        idx, n_true_arr, content_full, p_full, r_full, eps_p, params)

    decoder_init = packed[:n_true, 0:dh].reshape(n_layers_decoder, n_true, dh)
    r_prior_proj = packed[:n_true, dh:dh + de].reshape(n_layers_decoder, n_true, de)
    p_pre = packed[:n_true, dh + de:dh + de + nc]
    r_pre = packed[:n_true, dh + de + nc:used]
    kl = packed[0, used]

    # TODO(synk): DecoderRNN (coverage losses, decoder outputs) source not provided.
    return kl, decoder_init, r_prior_proj, p_pre, r_pre


# --------------------------------------------------------------------------
if __name__ == "__main__":
    key = jax.random.PRNGKey(0)
    keys = jax.random.split(key, 16)

    # small config consistent with the module
    D_e = 32                # emotion feature size
    context_size = 48       # content / context feature size
    decoder_hidden_size = 32
    n_classes = 8
    batch_size = 2
    conversation_lengths = [8, 6]          # input_conversation_length
    max_len = max(conversation_lengths)
    half_max = max_len // 2
    N = sum(l // 2 for l in conversation_lengths)   # 7 sentences total

    # TODO(synk): EncoderRNN/ContextRNN/FeatureEtraction replaced by synthetic
    # features of the shapes the forward pass implies.
    content = jax.random.normal(keys[0], (batch_size, half_max, context_size),
                                jnp.float32)
    P_sen_emotions = jax.random.normal(keys[1], (batch_size, half_max, D_e),
                                       jnp.float32)
    R_sen_emotions = jax.random.normal(keys[2], (batch_size, half_max, D_e),
                                       jnp.float32)
    eps = jax.random.normal(keys[3], (N, D_e), jnp.float32)   # torch.randn

    def init_linear(k, fan_in, fan_out):
        kw, kb = jax.random.split(k)
        lim = 1.0 / (fan_in ** 0.5)
        w = jax.random.uniform(kw, (fan_in, fan_out), jnp.float32, -lim, lim)
        b = jax.random.uniform(kb, (1, fan_out), jnp.float32, -lim, lim)  # (1, out)
        return w, b

    raw = {}
    raw["w_e2p"], raw["b_e2p"] = init_linear(keys[4], D_e, D_e)     # emotion2pre
    raw["w_ph"], raw["b_ph"] = init_linear(keys[5], D_e, D_e)       # prior_h
    raw["w_mu"], raw["b_mu"] = init_linear(keys[6], D_e, D_e)       # prior_mu
    raw["w_var"], raw["b_var"] = init_linear(keys[7], D_e, D_e)     # prior_var
    raw["w_cls"], raw["b_cls"] = init_linear(keys[8], D_e, n_classes)
    raw["w_c2d"], raw["b_c2d"] = init_linear(keys[9], context_size,
                                             decoder_hidden_size)
    raw["w_c2de"], raw["b_c2de"] = init_linear(keys[10], D_e, D_e)

    params = prepare_params(raw)   # fuse mu|var, pre-cast weights to bf16 (once)

    outs = ethreed_head(content, P_sen_emotions, R_sen_emotions,
                        conversation_lengths, params, eps)
    outs = jax.block_until_ready(outs)

    kl, decoder_init, R_prior_proj, P_pre, R_pre = outs
    assert decoder_init.shape == (1, N, decoder_hidden_size)
    assert R_prior_proj.shape == (1, N, D_e)
    assert P_pre.shape == (N, n_classes)
    assert R_pre.shape == (N, n_classes)
    assert jnp.isfinite(kl)

    print("KERNEL_OK")
</pallas_src>

<mosaic_0001>
module attributes {stable_mosaic.version = 11 : i64} {
  func.func @_fused_head_kernel(%arg0: memref<8x1xi32, #tpu.memory_space<vmem>>, %arg1: memref<1xi32, #tpu.memory_space<smem>>, %arg2: memref<8x48xf32, #tpu.memory_space<vmem>>, %arg3: memref<8x32xf32, #tpu.memory_space<vmem>>, %arg4: memref<8x32xf32, #tpu.memory_space<vmem>>, %arg5: memref<8x32xf32, #tpu.memory_space<vmem>>, %arg6: memref<32x32xbf16, #tpu.memory_space<vmem>>, %arg7: memref<1x32xf32, #tpu.memory_space<vmem>>, %arg8: memref<32x32xbf16, #tpu.memory_space<vmem>>, %arg9: memref<1x32xf32, #tpu.memory_space<vmem>>, %arg10: memref<32x64xbf16, #tpu.memory_space<vmem>>, %arg11: memref<1x64xf32, #tpu.memory_space<vmem>>, %arg12: memref<32x8xf32, #tpu.memory_space<vmem>>, %arg13: memref<1x8xf32, #tpu.memory_space<vmem>>, %arg14: memref<48x32xbf16, #tpu.memory_space<vmem>>, %arg15: memref<1x32xf32, #tpu.memory_space<vmem>>, %arg16: memref<32x32xbf16, #tpu.memory_space<vmem>>, %arg17: memref<1x32xf32, #tpu.memory_space<vmem>>, %arg18: memref<8x128xf32, #tpu.memory_space<vmem>>) attributes {dimension_semantics = [], scalar_prefetch = 0 : i64, scratch_operands = 0 : i64, tpu.core_type = #tpu.core_type<tc>} {
    %c0 = arith.constant 0 : index
    %c0_0 = arith.constant 0 : index
    %0 = vector.load %arg0[%c0, %c0_0] : memref<8x1xi32, #tpu.memory_space<vmem>>, vector<8x1xi32>
    %1 = tpu.iota {dimensions = array<i32: 1>} : vector<8x8xi32>
    %2 = vector.broadcast %0 : vector<8x1xi32> to vector<8x8xi32>
    %3 = arith.cmpi eq, %1, %2 : vector<8x8xi32>
    %4 = arith.extui %3 : vector<8x8xi1> to vector<8x8xi32>
    %5 = arith.sitofp %4 : vector<8x8xi32> to vector<8x8xf32>
    %c0_1 = arith.constant 0 : index
    %c0_2 = arith.constant 0 : index
    %6 = vector.load %arg2[%c0_1, %c0_2] : memref<8x48xf32, #tpu.memory_space<vmem>>, vector<8x48xf32>
    %c0_3 = arith.constant 0 : index
    %c0_4 = arith.constant 0 : index
    %7 = vector.load %arg3[%c0_3, %c0_4] : memref<8x32xf32, #tpu.memory_space<vmem>>, vector<8x32xf32>
    %c0_5 = arith.constant 0 : index
    %c0_6 = arith.constant 0 : index
    %8 = vector.load %arg4[%c0_5, %c0_6] : memref<8x32xf32, #tpu.memory_space<vmem>>, vector<8x32xf32>
    %9 = tpu.concatenate %6, %7, %8 in 1 : vector<8x48xf32>, vector<8x32xf32>, vector<8x32xf32> -> vector<8x112xf32>
    %cst = arith.constant dense<0.000000e+00> : vector<8x112xf32>
    %10 = tpu.matmul %5, %9, %cst {dimension_numbers = #tpu.dot_dimension_numbers<[1], [0], [0], [1], [0, 0, 1, 1], [], []>} : vector<8x8xf32>, vector<8x112xf32>, vector<8x112xf32> -> vector<8x112xf32>
    %11 = vector.extract_strided_slice %10 {offsets = [0, 0], sizes = [8, 48], strides = [1, 1]} : vector<8x112xf32> to vector<8x48xf32>
    %12 = vector.extract_strided_slice %10 {offsets = [0, 48], sizes = [8, 32], strides = [1, 1]} : vector<8x112xf32> to vector<8x32xf32>
    %13 = vector.extract_strided_slice %10 {offsets = [0, 80], sizes = [8, 32], strides = [1, 1]} : vector<8x112xf32> to vector<8x32xf32>
    %14 = arith.truncf %12 : vector<8x32xf32> to vector<8x32xbf16>
    %c0_7 = arith.constant 0 : index
    %c0_8 = arith.constant 0 : index
    %15 = vector.load %arg6[%c0_7, %c0_8] : memref<32x32xbf16, #tpu.memory_space<vmem>>, vector<32x32xbf16>
    %cst_9 = arith.constant dense<0.000000e+00> : vector<8x32xf32>
    %16 = tpu.matmul %14, %15, %cst_9 {dimension_numbers = #tpu.dot_dimension_numbers<[1], [0], [0], [1], [0, 0, 1, 1], [], []>} : vector<8x32xbf16>, vector<32x32xbf16>, vector<8x32xf32> -> vector<8x32xf32>
    %c0_10 = arith.constant 0 : index
    %c0_11 = arith.constant 0 : index
    %17 = vector.load %arg7[%c0_10, %c0_11] : memref<1x32xf32, #tpu.memory_space<vmem>>, vector<1x32xf32>
    %18 = vector.broadcast %17 : vector<1x32xf32> to vector<8x32xf32>
    %19 = arith.addf %16, %18 : vector<8x32xf32>
    %20 = math.tanh %19 : vector<8x32xf32>
    %21 = arith.truncf %20 : vector<8x32xf32> to vector<8x32xbf16>
    %c0_12 = arith.constant 0 : index
    %c0_13 = arith.constant 0 : index
    %22 = vector.load %arg8[%c0_12, %c0_13] : memref<32x32xbf16, #tpu.memory_space<vmem>>, vector<32x32xbf16>
    %cst_14 = arith.constant dense<0.000000e+00> : vector<8x32xf32>
    %23 = tpu.matmul %21, %22, %cst_14 {dimension_numbers = #tpu.dot_dimension_numbers<[1], [0], [0], [1], [0, 0, 1, 1], [], []>} : vector<8x32xbf16>, vector<32x32xbf16>, vector<8x32xf32> -> vector<8x32xf32>
    %c0_15 = arith.constant 0 : index
    %c0_16 = arith.constant 0 : index
    %24 = vector.load %arg9[%c0_15, %c0_16] : memref<1x32xf32, #tpu.memory_space<vmem>>, vector<1x32xf32>
    %25 = vector.broadcast %24 : vector<1x32xf32> to vector<8x32xf32>
    %26 = arith.addf %23, %25 : vector<8x32xf32>
    %27 = math.tanh %26 : vector<8x32xf32>
    %28 = arith.truncf %27 : vector<8x32xf32> to vector<8x32xbf16>
    %c0_17 = arith.constant 0 : index
    %c0_18 = arith.constant 0 : index
    %29 = vector.load %arg10[%c0_17, %c0_18] : memref<32x64xbf16, #tpu.memory_space<vmem>>, vector<32x64xbf16>
    %cst_19 = arith.constant dense<0.000000e+00> : vector<8x64xf32>
    %30 = tpu.matmul %28, %29, %cst_19 {dimension_numbers = #tpu.dot_dimension_numbers<[1], [0], [0], [1], [0, 0, 1, 1], [], []>} : vector<8x32xbf16>, vector<32x64xbf16>, vector<8x64xf32> -> vector<8x64xf32>
    %c0_20 = arith.constant 0 : index
    %c0_21 = arith.constant 0 : index
    %31 = vector.load %arg11[%c0_20, %c0_21] : memref<1x64xf32, #tpu.memory_space<vmem>>, vector<1x64xf32>
    %32 = vector.broadcast %31 : vector<1x64xf32> to vector<8x64xf32>
    %33 = arith.addf %30, %32 : vector<8x64xf32>
    %34 = vector.extract_strided_slice %33 {offsets = [0, 0], sizes = [8, 32], strides = [1, 1]} : vector<8x64xf32> to vector<8x32xf32>
    %35 = vector.extract_strided_slice %33 {offsets = [0, 32], sizes = [8, 32], strides = [1, 1]} : vector<8x64xf32> to vector<8x32xf32>
    %cst_22 = arith.constant 0.000000e+00 : f32
    %36 = vector.broadcast %cst_22 : f32 to vector<8x32xf32>
    %37 = arith.maximumf %35, %36 : vector<8x32xf32>
    %38 = vector.broadcast %cst_22 : f32 to vector<8x32xf32>
    %39 = arith.subf %35, %38 : vector<8x32xf32>
    %40 = arith.cmpf one, %39, %39 : vector<8x32xf32>
    %41 = vector.broadcast %cst_22 : f32 to vector<8x32xf32>
    %42 = arith.addf %35, %41 : vector<8x32xf32>
    %43 = math.absf %39 : vector<8x32xf32>
    %cst_23 = arith.constant 0.000000e+00 : f32
    %44 = vector.broadcast %cst_23 : f32 to vector<8x32xf32>
    %45 = arith.subf %44, %43 : vector<8x32xf32>
    %46 = math.exp %45 : vector<8x32xf32>
    %47 = math.log1p %46 : vector<8x32xf32>
    %48 = arith.addf %37, %47 : vector<8x32xf32>
    %49 = arith.select %40, %42, %48 : vector<8x32xi1>, vector<8x32xf32>
    %50 = math.sqrt %49 : vector<8x32xf32>
    %c0_24 = arith.constant 0 : index
    %c0_25 = arith.constant 0 : index
    %51 = vector.load %arg5[%c0_24, %c0_25] : memref<8x32xf32, #tpu.memory_space<vmem>>, vector<8x32xf32>
    %52 = arith.mulf %50, %51 : vector<8x32xf32>
    %53 = arith.addf %34, %52 : vector<8x32xf32>
    %54 = tpu.concatenate %12, %13, %53 in 0 : vector<8x32xf32>, vector<8x32xf32>, vector<8x32xf32> -> vector<24x32xf32>
    %c0_26 = arith.constant 0 : index
    %c0_27 = arith.constant 0 : index
    %55 = vector.load %arg12[%c0_26, %c0_27] : memref<32x8xf32, #tpu.memory_space<vmem>>, vector<32x8xf32>
    %cst_28 = arith.constant dense<0.000000e+00> : vector<24x8xf32>
    %56 = tpu.matmul %54, %55, %cst_28 {dimension_numbers = #tpu.dot_dimension_numbers<[1], [0], [0], [1], [0, 0, 1, 1], [], []>} : vector<24x32xf32>, vector<32x8xf32>, vector<24x8xf32> -> vector<24x8xf32>
    %c0_29 = arith.constant 0 : index
    %c0_30 = arith.constant 0 : index
    %57 = vector.load %arg13[%c0_29, %c0_30] : memref<1x8xf32, #tpu.memory_space<vmem>>, vector<1x8xf32>
    %58 = vector.broadcast %57 : vector<1x8xf32> to vector<24x8xf32>
    %59 = arith.addf %56, %58 : vector<24x8xf32>
    %60 = vector.extract_strided_slice %59 {offsets = [0, 0], sizes = [8, 8], strides = [1, 1]} : vector<24x8xf32> to vector<8x8xf32>
    %61 = vector.extract_strided_slice %59 {offsets = [8, 0], sizes = [8, 8], strides = [1, 1]} : vector<24x8xf32> to vector<8x8xf32>
    %62 = vector.extract_strided_slice %59 {offsets = [16, 0], sizes = [8, 8], strides = [1, 1]} : vector<24x8xf32> to vector<8x8xf32>
    %cst_31 = arith.constant dense<0xFF800000> : vector<8xf32>
    %63 = vector.multi_reduction <maximumf>, %62, %cst_31 [1] : vector<8x8xf32> to vector<8xf32>
    %64 = vector.shape_cast %63 : vector<8xf32> to vector<8x1xf32>
    %65 = vector.broadcast %64 : vector<8x1xf32> to vector<8x8xf32>
    %66 = arith.subf %62, %65 : vector<8x8xf32>
    %67 = vector.broadcast %64 : vector<8x1xf32> to vector<8x8xf32>
    %68 = arith.subf %62, %67 : vector<8x8xf32>
    %69 = math.exp %68 : vector<8x8xf32>
    %cst_32 = arith.constant dense<0.000000e+00> : vector<8xf32>
    %70 = vector.multi_reduction <add>, %69, %cst_32 [1] : vector<8x8xf32> to vector<8xf32>
    %71 = vector.shape_cast %70 : vector<8xf32> to vector<8x1xf32>
    %72 = math.log %71 : vector<8x1xf32>
    %73 = vector.broadcast %72 : vector<8x1xf32> to vector<8x8xf32>
    %74 = arith.subf %66, %73 : vector<8x8xf32>
    %cst_33 = arith.constant dense<0xFF800000> : vector<8xf32>
    %75 = vector.multi_reduction <maximumf>, %61, %cst_33 [1] : vector<8x8xf32> to vector<8xf32>
    %76 = vector.shape_cast %75 : vector<8xf32> to vector<8x1xf32>
    %77 = vector.broadcast %76 : vector<8x1xf32> to vector<8x8xf32>
    %78 = arith.subf %61, %77 : vector<8x8xf32>
    %79 = vector.broadcast %76 : vector<8x1xf32> to vector<8x8xf32>
    %80 = arith.subf %61, %79 : vector<8x8xf32>
    %81 = math.exp %80 : vector<8x8xf32>
    %cst_34 = arith.constant dense<0.000000e+00> : vector<8xf32>
    %82 = vector.multi_reduction <add>, %81, %cst_34 [1] : vector<8x8xf32> to vector<8xf32>
    %83 = vector.shape_cast %82 : vector<8xf32> to vector<8x1xf32>
    %84 = math.log %83 : vector<8x1xf32>
    %85 = vector.broadcast %84 : vector<8x1xf32> to vector<8x8xf32>
    %86 = arith.subf %78, %85 : vector<8x8xf32>
    %87 = math.exp %86 : vector<8x8xf32>
    %88 = arith.subf %86, %74 : vector<8x8xf32>
    %89 = arith.mulf %87, %88 : vector<8x8xf32>
    %c0_35 = arith.constant 0 : index
    %90 = memref.load %arg1[%c0_35] : memref<1xi32, #tpu.memory_space<smem>>
    %91 = tpu.iota {dimensions = array<i32: 0>} : vector<8x8xi32>
    %92 = vector.broadcast %90 : i32 to vector<8x8xi32>
    %93 = arith.cmpi slt, %91, %92 : vector<8x8xi32>
    %cst_36 = arith.constant 0.000000e+00 : f32
    %94 = vector.broadcast %cst_36 : f32 to vector<8x8xf32>
    %95 = arith.select %93, %89, %94 : vector<8x8xi1>, vector<8x8xf32>
    %cst_37 = arith.constant dense<0.000000e+00> : vector<8xf32>
    %96 = vector.multi_reduction <add>, %95, %cst_37 [1] : vector<8x8xf32> to vector<8xf32>
    %97 = vector.shape_cast %96 : vector<8xf32> to vector<8x1xf32>
    %cst_38 = arith.constant dense<0.000000e+00> : vector<1xf32>
    %98 = vector.multi_reduction <add>, %97, %cst_38 [0] : vector<8x1xf32> to vector<1xf32>
    %99 = vector.shape_cast %98 : vector<1xf32> to vector<1x1xf32>
    %100 = arith.sitofp %90 : i32 to f32
    %cst_39 = arith.constant 8.000000e+00 : f32
    %101 = arith.mulf %100, %cst_39 : f32
    %102 = vector.broadcast %101 : f32 to vector<1x1xf32>
    %103 = arith.divf %99, %102 : vector<1x1xf32>
    %104 = arith.truncf %11 : vector<8x48xf32> to vector<8x48xbf16>
    %c0_40 = arith.constant 0 : index
    %c0_41 = arith.constant 0 : index
    %105 = vector.load %arg14[%c0_40, %c0_41] : memref<48x32xbf16, #tpu.memory_space<vmem>>, vector<48x32xbf16>
    %cst_42 = arith.constant dense<0.000000e+00> : vector<8x32xf32>
    %106 = tpu.matmul %104, %105, %cst_42 {dimension_numbers = #tpu.dot_dimension_numbers<[1], [0], [0], [1], [0, 0, 1, 1], [], []>} : vector<8x48xbf16>, vector<48x32xbf16>, vector<8x32xf32> -> vector<8x32xf32>
    %c0_43 = arith.constant 0 : index
    %c0_44 = arith.constant 0 : index
    %107 = vector.load %arg15[%c0_43, %c0_44] : memref<1x32xf32, #tpu.memory_space<vmem>>, vector<1x32xf32>
    %108 = vector.broadcast %107 : vector<1x32xf32> to vector<8x32xf32>
    %109 = arith.addf %106, %108 : vector<8x32xf32>
    %110 = math.tanh %109 : vector<8x32xf32>
    %111 = arith.truncf %53 : vector<8x32xf32> to vector<8x32xbf16>
    %c0_45 = arith.constant 0 : index
    %c0_46 = arith.constant 0 : index
    %112 = vector.load %arg16[%c0_45, %c0_46] : memref<32x32xbf16, #tpu.memory_space<vmem>>, vector<32x32xbf16>
    %cst_47 = arith.constant dense<0.000000e+00> : vector<8x32xf32>
    %113 = tpu.matmul %111, %112, %cst_47 {dimension_numbers = #tpu.dot_dimension_numbers<[1], [0], [0], [1], [0, 0, 1, 1], [], []>} : vector<8x32xbf16>, vector<32x32xbf16>, vector<8x32xf32> -> vector<8x32xf32>
    %c0_48 = arith.constant 0 : index
    %c0_49 = arith.constant 0 : index
    %114 = vector.load %arg17[%c0_48, %c0_49] : memref<1x32xf32, #tpu.memory_space<vmem>>, vector<1x32xf32>
    %115 = vector.broadcast %114 : vector<1x32xf32> to vector<8x32xf32>
    %116 = arith.addf %113, %115 : vector<8x32xf32>
    %117 = math.tanh %116 : vector<8x32xf32>
    %118 = vector.shape_cast %103 : vector<1x1xf32> to vector<1x1xf32>
    %119 = vector.broadcast %118 : vector<1x1xf32> to vector<8x48xf32>
    %120 = tpu.concatenate %110, %117, %60, %61, %119 in 1 : vector<8x32xf32>, vector<8x32xf32>, vector<8x8xf32>, vector<8x8xf32>, vector<8x48xf32> -> vector<8x128xf32>
    %c0_50 = arith.constant 0 : index
    %c0_51 = arith.constant 0 : index
    %121 = vector.load %arg18[%c0_50, %c0_51] : memref<8x128xf32, #tpu.memory_space<vmem>>, vector<8x128xf32>
    tpu.vector_store %arg18[%c0_50, %c0_51], %120 {strides = array<i32>} : memref<8x128xf32, #tpu.memory_space<vmem>>, vector<8x128xf32>,
    return
  }
}

</mosaic_0001>

<llo_original>
// kernel: tpu_custom_call.1
$region0: #{tpu_custom_call.1}
  #allocation0 [shape = 'u32[]', space=smem, size = 0x4, offset = 0x4, fixed_abs, tag = 'smem constant byte address 0x4 - core index']
  #allocation1 [shape = 'u32[144,128]{1,0:T(1,128)}', space=vmem, size = 0x12000, scoped, tag = 'internal scratch']
  #allocation2 [shape = 's32[1]{0:T(128)S(6)}', space=smem, size = 0x200, scoped, tag = 'scoped memory for tpu_custom_call.1']
  %s0 = inlined_call_operand.vmem [shape: s32[8,1], index: 0, kind: input, shape index: {}]
  %s1 = inlined_call_operand.<no memory space> [shape: s32[1], index: 1, kind: input, shape index: {}]
  %s2 = inlined_call_operand.vmem [shape: f32[8,48], index: 2, kind: input, shape index: {}]
  %s3 = inlined_call_operand.vmem [shape: f32[8,32], index: 3, kind: input, shape index: {}]
  %s4 = inlined_call_operand.hbm [shape: f32[8,32], index: 4, kind: input, shape index: {}]
  %s5 = inlined_call_operand.hbm [shape: f32[8,32], index: 5, kind: input, shape index: {}]
  %s6 = inlined_call_operand.vmem [shape: bf16[32,32], index: 6, kind: input, shape index: {}]
  %s7 = inlined_call_operand.vmem [shape: f32[1,32], index: 7, kind: input, shape index: {}]
  %s8 = inlined_call_operand.vmem [shape: bf16[32,32], index: 8, kind: input, shape index: {}]
  %s9 = inlined_call_operand.vmem [shape: f32[1,32], index: 9, kind: input, shape index: {}]
  %s10 = inlined_call_operand.vmem [shape: bf16[32,64], index: 10, kind: input, shape index: {}]
  %s11 = inlined_call_operand.vmem [shape: f32[1,64], index: 11, kind: input, shape index: {}]
  %s12 = inlined_call_operand.vmem [shape: f32[32,8], index: 12, kind: input, shape index: {}]
  %s13 = inlined_call_operand.vmem [shape: f32[1,8], index: 13, kind: input, shape index: {}]
  %s14 = inlined_call_operand.vmem [shape: bf16[48,32], index: 14, kind: input, shape index: {}]
  %s15 = inlined_call_operand.vmem [shape: f32[1,32], index: 15, kind: input, shape index: {}]
  %s16 = inlined_call_operand.vmem [shape: bf16[32,32], index: 16, kind: input, shape index: {}]
  %s17 = inlined_call_operand.vmem [shape: f32[1,32], index: 17, kind: input, shape index: {}]
  %s18 = inlined_call_operand.hbm [shape: f32[8,128], index: 18, kind: output, shape index: {}]
  %s19 = sld [smem:[#allocation0]]
  $region90: #{tpu_custom_call.1} parent=0
    _
  %s21 = ssub.s32 1, %s19
  %s22 = scalar_select 0, %s21, %s19
  %23 = sst [smem:[#allocation2]] %s1
  $region1: #{tpu_custom_call.1} parent=0
    #allocation3 [shape = 'u8[4096]{0}', space=vmem, size = 0x1000, scoped, tag = 'input window, operand 4, single buffered']
    #allocation4 [shape = 's32[1]{0}', space=sflag, size = 0x4, scoped, tag = 'scoped memory for tpu_custom_call.1']
    #allocation5 [shape = 's32[1]{0}', space=sflag, size = 0x4, scoped, tag = 'scoped memory for tpu_custom_call.1']
    #allocation6 [shape = 'u8[4096]{0}', space=vmem, size = 0x1000, scoped, tag = 'input window, operand 5, single buffered']
    #allocation7 [shape = 's32[1]{0}', space=sflag, size = 0x4, scoped, tag = 'scoped memory for tpu_custom_call.1']
    #allocation8 [shape = 'u8[4096]{0}', space=vmem, size = 0x1000, scoped, tag = 'output window, operand 0, single buffered']
    %24 = vsyncpa [#allocation4], 0
    %25 = vsyncpa [#allocation7], 0
    %26 = vsyncpa [#allocation5], 0
    // Predicated region
    $region2: #{tpu_custom_call.1} parent=1 // pred_check
      _
    $region3: #{tpu_custom_call.1} parent=1 // pred_check_branch
      %28 = sbr.rel (0) target = $region5
    $region4: #{tpu_custom_call.1} parent=1 // pred_region
      _
    $region5: #{tpu_custom_call.1} parent=1 // pred_fallthru
      _
    // Predicated region
    $region6: #{tpu_custom_call.1} parent=1 // pred_check
      _
    $region7: #{tpu_custom_call.1} parent=1 // pred_check_branch
      %30 = sbr.rel (0) target = $region9
    $region8: #{tpu_custom_call.1} parent=1 // pred_region
      _
    $region9: #{tpu_custom_call.1} parent=1 // pred_fallthru
      _
    // Predicated region
    $region10: #{tpu_custom_call.1} parent=1 // pred_check
      _
    $region11: #{tpu_custom_call.1} parent=1 // pred_check_branch
      %32 = sbr.rel (0) target = $region13
    $region12: #{tpu_custom_call.1} parent=1 // pred_region
      _
    $region13: #{tpu_custom_call.1} parent=1 // pred_fallthru
      _
    // Predicated region
    $region14: #{tpu_custom_call.1} parent=1 // pred_check
      _
    $region15: #{tpu_custom_call.1} parent=1 // pred_check_branch
      %34 = sbr.rel (0) target = $region17
    $region16: #{tpu_custom_call.1} parent=1 // pred_region
      _
    $region17: #{tpu_custom_call.1} parent=1 // pred_fallthru
      _
    // Predicated region
    $region18: #{tpu_custom_call.1} parent=1 // pred_check
      _
    $region19: #{tpu_custom_call.1} parent=1 // pred_check_branch
      %36 = sbr.rel (0) target = $region21
    $region20: #{tpu_custom_call.1} parent=1 // pred_region
      %s38 = ssub.s32 128, 128
      %39 = vsyncadd [#allocation4], %s38
      %s41 = sshll.u32 [#allocation3], 4
      %s42 = int_to_ptr.vmem [resolvable:$true] %s41
      %44 = dma.hbm_to_vmem [thread:$0]  %s4, 128, %s42, [#allocation4]
    $region21: #{tpu_custom_call.1} parent=1 // pred_fallthru
      _
    // Predicated region
    $region22: #{tpu_custom_call.1} parent=1 // pred_check
      _
    $region23: #{tpu_custom_call.1} parent=1 // pred_check_branch
      %46 = sbr.rel (0) target = $region25
    $region24: #{tpu_custom_call.1} parent=1 // pred_region
      %s48 = ssub.s32 128, 128
      %49 = vsyncadd [#allocation7], %s48
      %s51 = sshll.u32 [#allocation6], 4
      %s52 = int_to_ptr.vmem [resolvable:$true] %s51
      %54 = dma.hbm_to_vmem [thread:$0]  %s5, 128, %s52, [#allocation7]
    $region25: #{tpu_custom_call.1} parent=1 // pred_fallthru
      _
    // Predicated region
    $region26: #{tpu_custom_call.1} parent=1 // pred_check
      _
    $region27: #{tpu_custom_call.1} parent=1 // pred_check_branch
      %56 = sbr.rel (0) target = $region29
    $region28: #{tpu_custom_call.1} parent=1 // pred_region
      _
    $region29: #{tpu_custom_call.1} parent=1 // pred_fallthru
      _
    // Predicated region
    $region30: #{tpu_custom_call.1} parent=1 // pred_check
      _
    $region31: #{tpu_custom_call.1} parent=1 // pred_check_branch
      %58 = sbr.rel (0) target = $region33
    $region32: #{tpu_custom_call.1} parent=1 // pred_region
      _
    $region33: #{tpu_custom_call.1} parent=1 // pred_fallthru
      _
    // Predicated region
    $region34: #{tpu_custom_call.1} parent=1 // pred_check
      _
    $region35: #{tpu_custom_call.1} parent=1 // pred_check_branch
      %60 = sbr.rel (0) target = $region37
    $region36: #{tpu_custom_call.1} parent=1 // pred_region
      _
    $region37: #{tpu_custom_call.1} parent=1 // pred_fallthru
      _
    // Predicated region
    $region38: #{tpu_custom_call.1} parent=1 // pred_check
      _
    $region39: #{tpu_custom_call.1} parent=1 // pred_check_branch
      %62 = sbr.rel (0) target = $region41
    $region40: #{tpu_custom_call.1} parent=1 // pred_region
      _
    $region41: #{tpu_custom_call.1} parent=1 // pred_fallthru
      _
    // Predicated region
    $region42: #{tpu_custom_call.1} parent=1 // pred_check
      _
    $region43: #{tpu_custom_call.1} parent=1 // pred_check_branch
      %64 = sbr.rel (0) target = $region45
    $region44: #{tpu_custom_call.1} parent=1 // pred_region
      _
    $region45: #{tpu_custom_call.1} parent=1 // pred_fallthru
      _
    // Predicated region
    $region46: #{tpu_custom_call.1} parent=1 // pred_check
      _
    $region47: #{tpu_custom_call.1} parent=1 // pred_check_branch
      %66 = sbr.rel (0) target = $region49
    $region48: #{tpu_custom_call.1} parent=1 // pred_region
      _
    $region49: #{tpu_custom_call.1} parent=1 // pred_fallthru
      _
    // Predicated region
    $region50: #{tpu_custom_call.1} parent=1 // pred_check
      _
    $region51: #{tpu_custom_call.1} parent=1 // pred_check_branch
      %68 = sbr.rel (0) target = $region53
    $region52: #{tpu_custom_call.1} parent=1 // pred_region
      _
    $region53: #{tpu_custom_call.1} parent=1 // pred_fallthru
      _
    // Predicated region
    $region54: #{tpu_custom_call.1} parent=1 // pred_check
      _
    $region55: #{tpu_custom_call.1} parent=1 // pred_check_branch
      %70 = sbr.rel (0) target = $region57
    $region56: #{tpu_custom_call.1} parent=1 // pred_region
      _
    $region57: #{tpu_custom_call.1} parent=1 // pred_fallthru
      _
    // Predicated region
    $region58: #{tpu_custom_call.1} parent=1 // pred_check
      _
    $region59: #{tpu_custom_call.1} parent=1 // pred_check_branch
      %72 = sbr.rel (0) target = $region61
    $region60: #{tpu_custom_call.1} parent=1 // pred_region
      _
    $region61: #{tpu_custom_call.1} parent=1 // pred_fallthru
      _
    // Predicated region
    $region62: #{tpu_custom_call.1} parent=1 // pred_check
      _
    $region63: #{tpu_custom_call.1} parent=1 // pred_check_branch
      %74 = sbr.rel (0) target = $region65
    $region64: #{tpu_custom_call.1} parent=1 // pred_region
      _
    $region65: #{tpu_custom_call.1} parent=1 // pred_fallthru
      _
    // Predicated region
    $region66: #{tpu_custom_call.1} parent=1 // pred_check
      _
    $region67: #{tpu_custom_call.1} parent=1 // pred_check_branch
      %76 = sbr.rel (0) target = $region69
    $region68: #{tpu_custom_call.1} parent=1 // pred_region
      _
    $region69: #{tpu_custom_call.1} parent=1 // pred_fallthru
      _
    // Predicated region
    $region70: #{tpu_custom_call.1} parent=1 // pred_check
      _
    $region71: #{tpu_custom_call.1} parent=1 // pred_check_branch
      %78 = sbr.rel (0) target = $region73
    $region72: #{tpu_custom_call.1} parent=1 // pred_region
      _
    $region73: #{tpu_custom_call.1} parent=1 // pred_fallthru
      _
    // Predicated region
    $region74: #{tpu_custom_call.1} parent=1 // pred_check
      _
    $region75: #{tpu_custom_call.1} parent=1 // pred_check_branch
      %80 = sbr.rel (0) target = $region77
    $region76: #{tpu_custom_call.1} parent=1 // pred_region
      %81 = dma.done [#allocation4], 128
    $region77: #{tpu_custom_call.1} parent=1 // pred_fallthru
      _
    // Predicated region
    $region78: #{tpu_custom_call.1} parent=1 // pred_check
      _
    $region79: #{tpu_custom_call.1} parent=1 // pred_check_branch
      %83 = sbr.rel (0) target = $region81
    $region80: #{tpu_custom_call.1} parent=1 // pred_region
      %84 = dma.done [#allocation7], 128
    $region81: #{tpu_custom_call.1} parent=1 // pred_fallthru
      _
    %v86 = vld [vmem:[%s0] sm:$0xff]
    %v87 = vlaneseq
    %v88 = vand.u32 %v87, 127
    %89 = vset.pattern.permute.xlu0 0
    %90 = vperm.xlu0 %89, %v86
    %v91 = vpop.permute.xlu0 %90
    %vm92 = vcmp.eq.s32.totalorder %v88, %v91
    %v93 = vsel %vm92, 1, 0
    %v94 = vcvt.s32.f32 %v93
    %v95 = vld [vmem:[%s2] sm:$0xff]
    %v96 = vld [vmem:[%s3] sm:$0xff]
    %v97 = vld [vmem:[#allocation3] sm:$0xff]
    %99 = vrot.lane.b32.xlu0 %v96, 48
    %v100 = vpop.permute.xlu0 %99
    %103 = vrot.lane.b32.xlu0 %v97, 80
    %v104 = vpop.permute.xlu0 %103
    %vm106 = vcmask 392192
    %v107 = vsel %vm106, %v95, %v100
    %vm108 = vcmask 654336
    %v109 = vsel %vm108, %v107, %v104
    %vm110 = vcmask 64512
    %v112 = vsel %vm110, %v94, 0
    %114 = vmatprep.subr.mxu0 0.0
    %115 = vmatpush1.msra.mxu0 %v109
    %116 = vmatprep.subr.mxu0 0.0
    %117 = vmatpush1.msra.mxu0 0.0
    %118 = vmatprep.subr.mxu0 0.0
    %119 = vmatpush1.msra.mxu0 0.0
    %120 = vmatprep.subr.mxu0 0.0
    %121 = vmatpush1.msra.mxu0 0.0
    %122 = vmatprep.subr.mxu0 0.0
    %123 = vmatpush1.msra.mxu0 0.0
    %124 = vmatprep.subr.mxu0 0.0
    %125 = vmatpush1.msra.mxu0 0.0
    %126 = vmatprep.subr.mxu0 0.0
    %127 = vmatpush1.msra.mxu0 0.0
    %128 = vmatprep.subr.mxu0 0.0
    %129 = vmatpush1.msra.mxu0 0.0
    %130 = vmatprep.subr.mxu0 0.0
    %131 = vmatpush1.msra.mxu0 0.0
    %132 = vmatprep.subr.mxu0 0.0
    %133 = vmatpush1.msra.mxu0 0.0
    %134 = vmatprep.subr.mxu0 0.0
    %135 = vmatpush1.msra.mxu0 0.0
    %136 = vmatprep.subr.mxu0 0.0
    %137 = vmatpush1.msra.mxu0 0.0
    %138 = vmatprep.subr.mxu0 0.0
    %139 = vmatpush1.msra.mxu0 0.0
    %140 = vmatprep.subr.mxu0 0.0
    %141 = vmatpush1.msra.mxu0 0.0
    %142 = vmatprep.subr.mxu0 0.0
    %143 = vmatpush1.msra.mxu0 0.0
    %144 = vmatprep.subr.mxu0 0.0
    %145 = vmatpush1.msra.mxu0 0.0
    %146 = vmatprep.subr.mxu0 0.0
    %147 = vmatpush1.msra.mxu0 0.0
    %148 = vmatprep.subr.mxu0 0.0
    %149 = vmatpush1.msra.mxu0 0.0
    %150 = vmatprep.subr.mxu0 0.0
    %151 = vmatpush1.msra.mxu0 0.0
    %152 = vmatprep.subr.mxu0 0.0
    %153 = vmatpush1.msra.mxu0 0.0
    %154 = vmatprep.subr.mxu0 0.0
    %155 = vmatpush1.msra.mxu0 0.0
    %156 = vmatprep.subr.mxu0 0.0
    %157 = vmatpush1.msra.mxu0 0.0
    %158 = vmatprep.subr.mxu0 0.0
    %159 = vmatpush1.msra.mxu0 0.0
    %160 = vmatprep.subr.mxu0 0.0
    %161 = vmatpush1.msra.mxu0 0.0
    %162 = vmatprep.subr.mxu0 0.0
    %163 = vmatpush1.msra.mxu0 0.0
    %164 = vmatprep.subr.mxu0 0.0
    %165 = vmatpush1.msra.mxu0 0.0
    %166 = vmatprep.subr.mxu0 0.0
    %167 = vmatpush1.msra.mxu0 0.0
    %168 = vmatprep.subr.mxu0 0.0
    %169 = vmatpush1.msra.mxu0 0.0
    %170 = vmatprep.subr.mxu0 0.0
    %171 = vmatpush1.msra.mxu0 0.0
    %172 = vmatprep.subr.mxu0 0.0
    %173 = vmatpush1.msra.mxu0 0.0
    %174 = vmatprep.subr.mxu0 0.0
    %175 = vmatpush1.msra.mxu0 0.0
    %176 = vmatprep.subr.mxu0 0.0
    %177 = vmatpush1.msra.mxu0 0.0
    %178 = vmatprep.mubr.f32.mxu0 0.0
    %179 = vmatmul.mubr.f32.gmra.mrb[0].mxu0 %v112
    %v180 = vpop.f32.mrb[0].mxu0
    %v181 = vadd.f32 0.0, %v180
    %v182 = vpop.f32.mrb[0].mxu0
    %183 = vdwg.mxu0
    %v184 = vpack.c.bf16 %v181, %v181
    %v185 = vld [vmem:[%s6] sm:$0xf]
    %v186 = vld [vmem:[%s6 + $0x4] sm:$0xf]
    %v187 = vld [vmem:[%s6 + $0x8] sm:$0xf]
    %v188 = vld [vmem:[%s6 + $0xc] sm:$0xf]
    %v189 = vld [vmem:[%s7] sm:$0x1]
    %v191 = vlaneseq
    %v192 = vshrl.u32 %v191, 7
    %v193 = vsub.s32 0, %v192
    %v194 = vrot.slane %v189, %v193
    %197 = vrot.lane.b32.xlu0 %v184, 80
    %v198 = vpop.permute.xlu0 %197
    %v203 = vunpack.c.l.b16 %v185
    %v204 = vunpack.c.l.b16 %v186
    %v205 = vunpack.c.l.b16 %v187
    %v206 = vunpack.c.l.b16 %v188
    %v207 = vpack.c.b16 %v204, %v203
    %v208 = vpack.c.b16 %v206, %v205
    %vm211 = vcmask 261120
    %v213 = vsel %vm211, %v198, 0
    %215 = vmatprep.subr.bf16.mxu0 0
    %216 = vmatpush1.bf16.msra.mxu0 %v207
    %217 = vmatprep.subr.bf16.mxu0 0
    %218 = vmatpush1.bf16.msra.mxu0 %v208
    %219 = vmatprep.subr.bf16.mxu0 0
    %220 = vmatpush1.bf16.msra.mxu0 0
    %221 = vmatprep.subr.bf16.mxu0 0
    %222 = vmatpush1.bf16.msra.mxu0 0
    %223 = vmatprep.subr.bf16.mxu0 0
    %224 = vmatpush1.bf16.msra.mxu0 0
    %225 = vmatprep.subr.bf16.mxu0 0
    %226 = vmatpush1.bf16.msra.mxu0 0
    %227 = vmatprep.subr.bf16.mxu0 0
    %228 = vmatpush1.bf16.msra.mxu0 0
    %229 = vmatprep.subr.bf16.mxu0 0
    %230 = vmatpush1.bf16.msra.mxu0 0
    %231 = vmatprep.subr.bf16.mxu0 0
    %232 = vmatpush1.bf16.msra.mxu0 0
    %233 = vmatprep.subr.bf16.mxu0 0
    %234 = vmatpush1.bf16.msra.mxu0 0
    %235 = vmatprep.subr.bf16.mxu0 0
    %236 = vmatpush1.bf16.msra.mxu0 0
    %237 = vmatprep.subr.bf16.mxu0 0
    %238 = vmatpush1.bf16.msra.mxu0 0
    %239 = vmatprep.subr.bf16.mxu0 0
    %240 = vmatpush1.bf16.msra.mxu0 0
    %241 = vmatprep.subr.bf16.mxu0 0
    %242 = vmatpush1.bf16.msra.mxu0 0
    %243 = vmatprep.subr.bf16.mxu0 0
    %244 = vmatpush1.bf16.msra.mxu0 0
    %245 = vmatprep.subr.bf16.mxu0 0
    %246 = vmatpush1.bf16.msra.mxu0 0
    %247 = vmatprep.mubr.bf16.mxu0 0
    %248 = vmatmul.mubr.bf16.gmra.mrb[0].mxu0 %v213
    %v249 = vpop.f32.mrb[0].mxu0
    %v250 = vadd.f32 %v194, %v249
    %v251 = vpop.f32.mrb[0].mxu0
    %v252 = vpop.f32.mrb[0].mxu0
    %v253 = vpop.f32.mrb[0].mxu0
    %254 = vdwg.mxu0
    %v255 = vtanh.pop %v250
    %v256 = vpack.c.bf16 %v255, %v255
    %v257 = vld [vmem:[%s8] sm:$0xf]
    %v258 = vld [vmem:[%s8 + $0x4] sm:$0xf]
    %v259 = vld [vmem:[%s8 + $0x8] sm:$0xf]
    %v260 = vld [vmem:[%s8 + $0xc] sm:$0xf]
    %v261 = vld [vmem:[%s9] sm:$0x1]
    %v263 = vlaneseq
    %v264 = vshrl.u32 %v263, 7
    %v265 = vsub.s32 0, %v264
    %v266 = vrot.slane %v261, %v265
    %v272 = vunpack.c.l.b16 %v257
    %v273 = vunpack.c.l.b16 %v258
    %v274 = vunpack.c.l.b16 %v259
    %v275 = vunpack.c.l.b16 %v260
    %v276 = vpack.c.b16 %v273, %v272
    %v277 = vpack.c.b16 %v275, %v274
    %v281 = vsel %vm211, %v256, 0
    %283 = vmatprep.subr.bf16.mxu0 0
    %284 = vmatpush1.bf16.msra.mxu0 %v276
    %285 = vmatprep.subr.bf16.mxu0 0
    %286 = vmatpush1.bf16.msra.mxu0 %v277
    %287 = vmatprep.subr.bf16.mxu0 0
    %288 = vmatpush1.bf16.msra.mxu0 0
    %289 = vmatprep.subr.bf16.mxu0 0
    %290 = vmatpush1.bf16.msra.mxu0 0
    %291 = vmatprep.subr.bf16.mxu0 0
    %292 = vmatpush1.bf16.msra.mxu0 0
    %293 = vmatprep.subr.bf16.mxu0 0
    %294 = vmatpush1.bf16.msra.mxu0 0
    %295 = vmatprep.subr.bf16.mxu0 0
    %296 = vmatpush1.bf16.msra.mxu0 0
    %297 = vmatprep.subr.bf16.mxu0 0
    %298 = vmatpush1.bf16.msra.mxu0 0
    %299 = vmatprep.subr.bf16.mxu0 0
    %300 = vmatpush1.bf16.msra.mxu0 0
    %301 = vmatprep.subr.bf16.mxu0 0
    %302 = vmatpush1.bf16.msra.mxu0 0
    %303 = vmatprep.subr.bf16.mxu0 0
    %304 = vmatpush1.bf16.msra.mxu0 0
    %305 = vmatprep.subr.bf16.mxu0 0
    %306 = vmatpush1.bf16.msra.mxu0 0
    %307 = vmatprep.subr.bf16.mxu0 0
    %308 = vmatpush1.bf16.msra.mxu0 0
    %309 = vmatprep.subr.bf16.mxu0 0
    %310 = vmatpush1.bf16.msra.mxu0 0
    %311 = vmatprep.subr.bf16.mxu0 0
    %312 = vmatpush1.bf16.msra.mxu0 0
    %313 = vmatprep.subr.bf16.mxu0 0
    %314 = vmatpush1.bf16.msra.mxu0 0
    %315 = vmatprep.mubr.bf16.mxu0 0
    %316 = vmatmul.mubr.bf16.gmra.mrb[0].mxu0 %v281
    %v317 = vpop.f32.mrb[0].mxu0
    %v318 = vadd.f32 %v266, %v317
    %v319 = vpop.f32.mrb[0].mxu0
    %v320 = vpop.f32.mrb[0].mxu0
    %v321 = vpop.f32.mrb[0].mxu0
    %322 = vdwg.mxu0
    %v323 = vtanh.pop %v318
    %v324 = vpack.c.bf16 %v323, %v323
    %v325 = vld [vmem:[%s10] sm:$0xf]
    %v326 = vld [vmem:[%s10 + $0x4] sm:$0xf]
    %v327 = vld [vmem:[%s10 + $0x8] sm:$0xf]
    %v328 = vld [vmem:[%s10 + $0xc] sm:$0xf]
    %v329 = vld [vmem:[%s11] sm:$0x1]
    %v331 = vlaneseq
    %v332 = vshrl.u32 %v331, 7
    %v333 = vsub.s32 0, %v332
    %v334 = vrot.slane %v329, %v333
    %v340 = vunpack.c.l.b16 %v325
    %v341 = vunpack.c.l.b16 %v326
    %v342 = vunpack.c.l.b16 %v327
    %v343 = vunpack.c.l.b16 %v328
    %v344 = vpack.c.b16 %v341, %v340
    %v345 = vpack.c.b16 %v343, %v342
    %v349 = vsel %vm211, %v324, 0
    %351 = vmatprep.subr.bf16.mxu0 0
    %352 = vmatpush1.bf16.msra.mxu0 %v344
    %353 = vmatprep.subr.bf16.mxu0 0
    %354 = vmatpush1.bf16.msra.mxu0 %v345
    %355 = vmatprep.subr.bf16.mxu0 0
    %356 = vmatpush1.bf16.msra.mxu0 0
    %357 = vmatprep.subr.bf16.mxu0 0
    %358 = vmatpush1.bf16.msra.mxu0 0
    %359 = vmatprep.subr.bf16.mxu0 0
    %360 = vmatpush1.bf16.msra.mxu0 0
    %361 = vmatprep.subr.bf16.mxu0 0
    %362 = vmatpush1.bf16.msra.mxu0 0
    %363 = vmatprep.subr.bf16.mxu0 0
    %364 = vmatpush1.bf16.msra.mxu0 0
    %365 = vmatprep.subr.bf16.mxu0 0
    %366 = vmatpush1.bf16.msra.mxu0 0
    %367 = vmatprep.subr.bf16.mxu0 0
    %368 = vmatpush1.bf16.msra.mxu0 0
    %369 = vmatprep.subr.bf16.mxu0 0
    %370 = vmatpush1.bf16.msra.mxu0 0
    %371 = vmatprep.subr.bf16.mxu0 0
    %372 = vmatpush1.bf16.msra.mxu0 0
    %373 = vmatprep.subr.bf16.mxu0 0
    %374 = vmatpush1.bf16.msra.mxu0 0
    %375 = vmatprep.subr.bf16.mxu0 0
    %376 = vmatpush1.bf16.msra.mxu0 0
    %377 = vmatprep.subr.bf16.mxu0 0
    %378 = vmatpush1.bf16.msra.mxu0 0
    %379 = vmatprep.subr.bf16.mxu0 0
    %380 = vmatpush1.bf16.msra.mxu0 0
    %381 = vmatprep.subr.bf16.mxu0 0
    %382 = vmatpush1.bf16.msra.mxu0 0
    %383 = vmatprep.mubr.bf16.mxu0 0
    %384 = vmatmul.mubr.bf16.gmra.mrb[0].mxu0 %v349
    %v385 = vpop.f32.mrb[0].mxu0
    %v386 = vadd.f32 %v334, %v385
    %v387 = vpop.f32.mrb[0].mxu0
    %v388 = vpop.f32.mrb[0].mxu0
    %v389 = vpop.f32.mrb[0].mxu0
    %390 = vdwg.mxu0
    %v391 = vmax.f32 %v386, 0.0
    %vm392 = vcmp.ne.f32.partialorder %v386, %v386
    %v393 = vadd.f32 %v386, 0.0
    %v394 = vand.u32 2147483647, %v386
    %v395 = vsub.f32 0.0, %v394
    %v396 = vmul.f32 %v395, 1.442695
    %v397 = vpow.pop %v396
    %v398 = vadd.f32 %v397, 1.0
    %v399 = vlog2.pop %v398
    %v400 = vmul.f32 %v399, 0.6931472
    %v401 = vmul.f32 -0.5, %v397
    %v402 = vadd.f32 %v401, 1.0
    %v403 = vmul.f32 %v402, %v397
    %v404 = vand.u32 2147483647, %v397
    %vm405 = vcmp.lt.f32.partialorder %v404, 0.0004427343
    %v406 = vsel %vm405, %v403, %v400
    %v407 = vadd.f32 %v391, %v406
    %v408 = vsel %vm392, %v393, %v407
    %v409 = vrsqrt.pop %v408
    %v410 = vmul.f32 %v408, %v409
    %vm411 = vcmp.eq.f32.partialorder %v408, inf
    %v412 = vsel %vm411, %v408, %v410
    %vm413 = vcmp.eq.f32.partialorder %v408, 0.0
    %v414 = vand.u32 %v408, 2147483648
    %v415 = vsel %vm413, %v414, %v412
    %v416 = vld [vmem:[#allocation6] sm:$0xff]
    %418 = vrot.lane.b32.xlu0 %v416, 32
    %v419 = vpop.permute.xlu0 %418
    %v421 = vmul.f32 %v415, %v419
    %423 = vrot.lane.b32.xlu0 %v421, 96
    %v424 = vpop.permute.xlu0 %423
    %v426 = vadd.f32 %v386, %v424
    %428 = vrot.lane.b32.xlu0 %v181, 96
    %v429 = vpop.permute.xlu0 %428
    %431 = vrot.lane.b32.xlu0 %v426, 48
    %v432 = vpop.permute.xlu0 %431
    %v433 = vld [vmem:[%s12] sm:$0xff]
    %v434 = vld [vmem:[%s12 + $0x8] sm:$0xff]
    %v435 = vld [vmem:[%s12 + $0x10] sm:$0xff]
    %v436 = vld [vmem:[%s12 + $0x18] sm:$0xff]
    %v437 = vld [vmem:[%s13] sm:$0x1]
    %v439 = vlaneseq
    %v440 = vshrl.u32 %v439, 7
    %v441 = vsub.s32 0, %v440
    %v442 = vrot.slane %v437, %v441
    %444 = vrot.lane.b32.xlu0 %v181, 80
    %v445 = vpop.permute.xlu0 %444
    %446 = vrot.lane.b32.xlu0 %v429, 80
    %v447 = vpop.permute.xlu0 %446
    %448 = vrot.lane.b32.xlu0 %v432, 80
    %v449 = vpop.permute.xlu0 %448
    %v450 = vsel %vm211, %v445, 0
    %v452 = vsel %vm211, %v447, 0
    %v454 = vsel %vm211, %v449, 0
    %456 = vmatprep.subr.mxu0 0.0
    %457 = vmatpush1.msra.mxu0 %v433
    %458 = vmatprep.subr.mxu0 0.0
    %459 = vmatpush1.msra.mxu0 %v434
    %460 = vmatprep.subr.mxu0 0.0
    %461 = vmatpush1.msra.mxu0 %v435
    %462 = vmatprep.subr.mxu0 0.0
    %463 = vmatpush1.msra.mxu0 %v436
    %464 = vmatprep.subr.mxu0 0.0
    %465 = vmatpush1.msra.mxu0 0.0
    %466 = vmatprep.subr.mxu0 0.0
    %467 = vmatpush1.msra.mxu0 0.0
    %468 = vmatprep.subr.mxu0 0.0
    %469 = vmatpush1.msra.mxu0 0.0
    %470 = vmatprep.subr.mxu0 0.0
    %471 = vmatpush1.msra.mxu0 0.0
    %472 = vmatprep.subr.mxu0 0.0
    %473 = vmatpush1.msra.mxu0 0.0
    %474 = vmatprep.subr.mxu0 0.0
    %475 = vmatpush1.msra.mxu0 0.0
    %476 = vmatprep.subr.mxu0 0.0
    %477 = vmatpush1.msra.mxu0 0.0
    %478 = vmatprep.subr.mxu0 0.0
    %479 = vmatpush1.msra.mxu0 0.0
    %480 = vmatprep.subr.mxu0 0.0
    %481 = vmatpush1.msra.mxu0 0.0
    %482 = vmatprep.subr.mxu0 0.0
    %483 = vmatpush1.msra.mxu0 0.0
    %484 = vmatprep.subr.mxu0 0.0
    %485 = vmatpush1.msra.mxu0 0.0
    %486 = vmatprep.subr.mxu0 0.0
    %487 = vmatpush1.msra.mxu0 0.0
    %488 = vmatprep.subr.mxu0 0.0
    %489 = vmatpush1.msra.mxu0 0.0
    %490 = vmatprep.subr.mxu0 0.0
    %491 = vmatpush1.msra.mxu0 0.0
    %492 = vmatprep.subr.mxu0 0.0
    %493 = vmatpush1.msra.mxu0 0.0
    %494 = vmatprep.subr.mxu0 0.0
    %495 = vmatpush1.msra.mxu0 0.0
    %496 = vmatprep.subr.mxu0 0.0
    %497 = vmatpush1.msra.mxu0 0.0
    %498 = vmatprep.subr.mxu0 0.0
    %499 = vmatpush1.msra.mxu0 0.0
    %500 = vmatprep.subr.mxu0 0.0
    %501 = vmatpush1.msra.mxu0 0.0
    %502 = vmatprep.subr.mxu0 0.0
    %503 = vmatpush1.msra.mxu0 0.0
    %504 = vmatprep.subr.mxu0 0.0
    %505 = vmatpush1.msra.mxu0 0.0
    %506 = vmatprep.subr.mxu0 0.0
    %507 = vmatpush1.msra.mxu0 0.0
    %508 = vmatprep.subr.mxu0 0.0
    %509 = vmatpush1.msra.mxu0 0.0
    %510 = vmatprep.subr.mxu0 0.0
    %511 = vmatpush1.msra.mxu0 0.0
    %512 = vmatprep.subr.mxu0 0.0
    %513 = vmatpush1.msra.mxu0 0.0
    %514 = vmatprep.subr.mxu0 0.0
    %515 = vmatpush1.msra.mxu0 0.0
    %516 = vmatprep.subr.mxu0 0.0
    %517 = vmatpush1.msra.mxu0 0.0
    %518 = vmatprep.subr.mxu0 0.0
    %519 = vmatpush1.msra.mxu0 0.0
    %520 = vmatprep.mubr.f32.mxu0 0.0
    %521 = vmatmul.mubr.f32.gmra.mrb[0].mxu0 %v450
    %v522 = vpop.f32.mrb[0].mxu0
    %v523 = vadd.f32 %v442, %v522
    %v524 = vpop.f32.mrb[0].mxu0
    %525 = vmatprep.mubr.f32.mxu0 0.0
    %526 = vmatmul.mubr.f32.gmra.mrb[0].mxu0 %v452
    %v527 = vpop.f32.mrb[0].mxu0
    %v528 = vadd.f32 %v442, %v527
    %v529 = vpop.f32.mrb[0].mxu0
    %530 = vmatprep.mubr.f32.mxu0 0.0
    %531 = vmatmul.mubr.f32.gmra.mrb[0].mxu0 %v454
    %v532 = vpop.f32.mrb[0].mxu0
    %v533 = vadd.f32 %v442, %v532
    %v534 = vpop.f32.mrb[0].mxu0
    %535 = vdwg.mxu0
    %v536 = vsel %vm110, %v533, -inf
    %537 = vmax.xlane.f32.xlu0 %v536
    %v538 = vpop.xlane.xlu0 %537
    %v539 = vsub.f32 %v533, %v538
    %v540 = vmul.f32 %v539, 1.442695
    %v541 = vpow.pop %v540
    %v542 = vsel %vm110, %v541, 0.0
    %543 = vadd.xlane.f32.xlu0 %v542
    %v544 = vpop.xlane.xlu0 %543
    %v545 = vlog2.pop %v544
    %v546 = vmul.f32 %v545, 0.6931472
    %v547 = vsub.f32 %v539, %v546
    %v548 = vsel %vm110, %v528, -inf
    %549 = vmax.xlane.f32.xlu0 %v548
    %v550 = vpop.xlane.xlu0 %549
    %v551 = vsub.f32 %v528, %v550
    %v552 = vmul.f32 %v551, 1.442695
    %v553 = vpow.pop %v552
    %v554 = vsel %vm110, %v553, 0.0
    %555 = vadd.xlane.f32.xlu0 %v554
    %v556 = vpop.xlane.xlu0 %555
    %v557 = vlog2.pop %v556
    %v558 = vmul.f32 %v557, 0.6931472
    %v559 = vsub.f32 %v551, %v558
    %v560 = vmul.f32 %v559, 1.442695
    %v561 = vpow.pop %v560
    %v562 = vsub.f32 %v559, %v547
    %v563 = vmul.f32 %v561, %v562
    %s564 = sld [smem:[#allocation2]]
    %v565 = vlaneseq
    %v566 = vshrl.u32 %v565, 7
    %v567 = vstv %s564
    %vm568 = vcmp.lt.s32.totalorder %v566, %v567
    %v569 = vsel %vm568, %v563, 0.0
    %v570 = vsel %vm110, %v569, 0.0
    %571 = vadd.xlane.f32.xlu0 %v570
    %v572 = vpop.xlane.xlu0 %571
    %v573 = vrot.slane %v572, 4
    %v574 = vadd.f32 %v572, %v573
    %v575 = vrot.slane %v574, 2
    %v576 = vadd.f32 %v574, %v575
    %v577 = vrot.slane %v576, 1
    %v578 = vadd.f32 %v576, %v577
    %s579 = scvt.s32.f32 %s564
    %s580 = smul.f32 %s579, 8.0
    %v581 = vstv %s580
    %v582 = vrcp.pop %v581
    %v583 = vmul.f32 %v578, %v582
    %v584 = vld [vmem:[%s14] sm:$0xf]
    %v585 = vld [vmem:[%s14 + $0x4] sm:$0xf]
    %v586 = vld [vmem:[%s14 + $0x8] sm:$0xf]
    %v587 = vld [vmem:[%s14 + $0xc] sm:$0xf]
    %v588 = vld [vmem:[%s14 + $0x10] sm:$0xf]
    %v589 = vld [vmem:[%s14 + $0x14] sm:$0xf]
    %v590 = vld [vmem:[%s15] sm:$0x1]
    %v592 = vlaneseq
    %v593 = vshrl.u32 %v592, 7
    %v594 = vsub.s32 0, %v593
    %v595 = vrot.slane %v590, %v594
    %v603 = vunpack.c.l.b16 %v584
    %v604 = vunpack.c.l.b16 %v585
    %v605 = vunpack.c.l.b16 %v586
    %v606 = vunpack.c.l.b16 %v587
    %v607 = vunpack.c.l.b16 %v588
    %v608 = vunpack.c.l.b16 %v589
    %v609 = vpack.c.b16 %v604, %v603
    %v610 = vpack.c.b16 %v606, %v605
    %v611 = vpack.c.b16 %v608, %v607
    %v616 = vsel %vm106, %v184, 0
    %618 = vmatprep.subr.bf16.mxu0 0
    %619 = vmatpush1.bf16.msra.mxu0 %v609
    %620 = vmatprep.subr.bf16.mxu0 0
    %621 = vmatpush1.bf16.msra.mxu0 %v610
    %622 = vmatprep.subr.bf16.mxu0 0
    %623 = vmatpush1.bf16.msra.mxu0 %v611
    %624 = vmatprep.subr.bf16.mxu0 0
    %625 = vmatpush1.bf16.msra.mxu0 0
    %626 = vmatprep.subr.bf16.mxu0 0
    %627 = vmatpush1.bf16.msra.mxu0 0
    %628 = vmatprep.subr.bf16.mxu0 0
    %629 = vmatpush1.bf16.msra.mxu0 0
    %630 = vmatprep.subr.bf16.mxu0 0
    %631 = vmatpush1.bf16.msra.mxu0 0
    %632 = vmatprep.subr.bf16.mxu0 0
    %633 = vmatpush1.bf16.msra.mxu0 0
    %634 = vmatprep.subr.bf16.mxu0 0
    %635 = vmatpush1.bf16.msra.mxu0 0
    %636 = vmatprep.subr.bf16.mxu0 0
    %637 = vmatpush1.bf16.msra.mxu0 0
    %638 = vmatprep.subr.bf16.mxu0 0
    %639 = vmatpush1.bf16.msra.mxu0 0
    %640 = vmatprep.subr.bf16.mxu0 0
    %641 = vmatpush1.bf16.msra.mxu0 0
    %642 = vmatprep.subr.bf16.mxu0 0
    %643 = vmatpush1.bf16.msra.mxu0 0
    %644 = vmatprep.subr.bf16.mxu0 0
    %645 = vmatpush1.bf16.msra.mxu0 0
    %646 = vmatprep.subr.bf16.mxu0 0
    %647 = vmatpush1.bf16.msra.mxu0 0
    %648 = vmatprep.subr.bf16.mxu0 0
    %649 = vmatpush1.bf16.msra.mxu0 0
    %650 = vmatprep.mubr.bf16.mxu0 0
    %651 = vmatmul.mubr.bf16.gmra.mrb[0].mxu0 %v616
    %v652 = vpop.f32.mrb[0].mxu0
    %v653 = vadd.f32 %v595, %v652
    %v654 = vpop.f32.mrb[0].mxu0
    %v655 = vpop.f32.mrb[0].mxu0
    %v656 = vpop.f32.mrb[0].mxu0
    %657 = vdwg.mxu0
    %v658 = vtanh.pop %v653
    %v659 = vpack.c.bf16 %v426, %v426
    %v660 = vld [vmem:[%s16] sm:$0xf]
    %v661 = vld [vmem:[%s16 + $0x4] sm:$0xf]
    %v662 = vld [vmem:[%s16 + $0x8] sm:$0xf]
    %v663 = vld [vmem:[%s16 + $0xc] sm:$0xf]
    %v664 = vld [vmem:[%s17] sm:$0x1]
    %v666 = vlaneseq
    %v667 = vshrl.u32 %v666, 7
    %v668 = vsub.s32 0, %v667
    %v669 = vrot.slane %v664, %v668
    %v675 = vunpack.c.l.b16 %v660
    %v676 = vunpack.c.l.b16 %v661
    %v677 = vunpack.c.l.b16 %v662
    %v678 = vunpack.c.l.b16 %v663
    %v679 = vpack.c.b16 %v676, %v675
    %v680 = vpack.c.b16 %v678, %v677
    %v684 = vsel %vm211, %v659, 0
    %686 = vmatprep.subr.bf16.mxu0 0
    %687 = vmatpush1.bf16.msra.mxu0 %v679
    %688 = vmatprep.subr.bf16.mxu0 0
    %689 = vmatpush1.bf16.msra.mxu0 %v680
    %690 = vmatprep.subr.bf16.mxu0 0
    %691 = vmatpush1.bf16.msra.mxu0 0
    %692 = vmatprep.subr.bf16.mxu0 0
    %693 = vmatpush1.bf16.msra.mxu0 0
    %694 = vmatprep.subr.bf16.mxu0 0
    %695 = vmatpush1.bf16.msra.mxu0 0
    %696 = vmatprep.subr.bf16.mxu0 0
    %697 = vmatpush1.bf16.msra.mxu0 0
    %698 = vmatprep.subr.bf16.mxu0 0
    %699 = vmatpush1.bf16.msra.mxu0 0
    %700 = vmatprep.subr.bf16.mxu0 0
    %701 = vmatpush1.bf16.msra.mxu0 0
    %702 = vmatprep.subr.bf16.mxu0 0
    %703 = vmatpush1.bf16.msra.mxu0 0
    %704 = vmatprep.subr.bf16.mxu0 0
    %705 = vmatpush1.bf16.msra.mxu0 0
    %706 = vmatprep.subr.bf16.mxu0 0
    %707 = vmatpush1.bf16.msra.mxu0 0
    %708 = vmatprep.subr.bf16.mxu0 0
    %709 = vmatpush1.bf16.msra.mxu0 0
    %710 = vmatprep.subr.bf16.mxu0 0
    %711 = vmatpush1.bf16.msra.mxu0 0
    %712 = vmatprep.subr.bf16.mxu0 0
    %713 = vmatpush1.bf16.msra.mxu0 0
    %714 = vmatprep.subr.bf16.mxu0 0
    %715 = vmatpush1.bf16.msra.mxu0 0
    %716 = vmatprep.subr.bf16.mxu0 0
    %717 = vmatpush1.bf16.msra.mxu0 0
    %718 = vmatprep.mubr.bf16.mxu0 0
    %719 = vmatmul.mubr.bf16.gmra.mrb[0].mxu0 %v684
    %v720 = vpop.f32.mrb[0].mxu0
    %v721 = vadd.f32 %v669, %v720
    %v722 = vpop.f32.mrb[0].mxu0
    %v723 = vpop.f32.mrb[0].mxu0
    %v724 = vpop.f32.mrb[0].mxu0
    %725 = vdwg.mxu0
    %v726 = vtanh.pop %v721
    %728 = vrot.lane.b32.xlu0 %v726, 32
    %v729 = vpop.permute.xlu0 %728
    %732 = vrot.lane.b32.xlu0 %v523, 64
    %v733 = vpop.permute.xlu0 %732
    %736 = vrot.lane.b32.xlu0 %v528, 72
    %v737 = vpop.permute.xlu0 %736
    %v739 = vsel %vm211, %v658, %v729
    %vm740 = vcmask 523264
    %v741 = vsel %vm740, %v739, %v733
    %vm742 = vcmask 588800
    %v743 = vsel %vm742, %v741, %v737
    %v744 = vsel %vm108, %v743, %v583
    %745 = vst [vmem:[#allocation8] sm:$0xff] %v744
    // Predicated region
    $region82: #{tpu_custom_call.1} parent=1 // pred_check
      _
    $region83: #{tpu_custom_call.1} parent=1 // pred_check_branch
      %747 = sbr.rel (0) target = $region85
    $region84: #{tpu_custom_call.1} parent=1 // pred_region
      %s749 = ssub.s32 128, 128
      %750 = vsyncadd [#allocation5], %s749
      %s752 = sshll.u32 [#allocation8], 4
      %s753 = int_to_ptr.vmem [resolvable:$true] %s752
      %755 = dma.vmem_to_hbm [thread:$0]  %s753, 128, %s18, [#allocation5]
    $region85: #{tpu_custom_call.1} parent=1 // pred_fallthru
      _
    // Predicated region
    $region86: #{tpu_custom_call.1} parent=1 // pred_check
      _
    $region87: #{tpu_custom_call.1} parent=1 // pred_check_branch
      %757 = sbr.rel (0) target = $region89
    $region88: #{tpu_custom_call.1} parent=1 // pred_region
      %758 = dma.done [#allocation5], 128
    $region89: #{tpu_custom_call.1} parent=1 // pred_fallthru
      _
    %759 = vsyncpa [#allocation4], 1
    %760 = vsyncpa [#allocation7], 1
    %761 = vsyncpa [#allocation5], 1

</llo_original>
